<compile_context>
chip_gen: v7x
topology: tpu7x:2x2x1
jax: 0.10.0
libtpu: 0.0.40
codegen_flags: <defaults>
</compile_context>

<pallas_src>
import math

import jax
import jax.numpy as jnp
from jax.experimental import pallas as pl
from jax.experimental.pallas import tpu as pltpu

EPS = 1e-4


def _make_kernel(rows_tile, total_rows, need_mask):
    """Build the per-tile kernel (static rows_tile / total_rows / mask flag)."""

    def kernel(x_ref, p_ref, out_ref, stat_ref):
        # x_ref    : (rows_tile, C_lanes) input tile (rows = folded T*B)
        # p_ref    : (4, C_lanes) packed per-channel constants [a, b, u, c]
        # out_ref  : (rows_tile, C_lanes) output tile (xn * u + c)
        # stat_ref : (1, 2, C_lanes) per-tile [sum xn ; sum xn^2]
        x = x_ref[...].astype(jnp.float32)
        p = p_ref[...]
        a = p[0:1, :]
        b = p[1:2, :]
        u = p[2:3, :]
        c = p[3:4, :]

        xn = x * a + b                                   # pre-affine normalize
        out_ref[...] = (xn * u + c).astype(out_ref.dtype)

        if need_mask:
            # Ragged last tile: zero out the rows past the end of the array so
            # garbage from the padded block read never reaches the stats.
            row_start = pl.program_id(0) * rows_tile
            row_ids = (
                jax.lax.broadcasted_iota(jnp.int32, (rows_tile, 1), 0)
                + row_start)
            valid = row_ids < total_rows
            xn_s = jnp.where(valid, xn, 0.0)
        else:
            xn_s = xn

        s1 = jnp.sum(xn_s, axis=0, keepdims=True)        # (1, C_lanes)
        s2 = jnp.sum(xn_s * xn_s, axis=0, keepdims=True)  # (1, C_lanes)
        stat_ref[...] = jnp.concatenate([s1, s2], axis=0)[None]

    return kernel


def _fold_factor(rows, c):
    """k such that (k*C) % 128 == 0 and rows % k == 0, else 1 (no fold)."""
    if c % 128 == 0:
        return 1
    k = 128 // math.gcd(c, 128)
    return k if rows % k == 0 else 1


def _block_and_vmem_budget():
    """Generation-aware (target_block_bytes, vmem_limit_bytes)."""
    kind = ""
    try:
        kind = jax.devices()[0].device_kind.lower()
    except Exception:  # pragma: no cover - defensive
        pass
    if "v6" in kind:
        # v6e: 128 MiB physical VMEM; 8 MiB blocks (32 MiB double-buffered).
        return 8 << 20, 64 << 20
    # v5e (16 MiB scoped default) and v7x (64 MiB physical VMEM per TC):
    # 4 MiB blocks keep 2x(in+out) double buffers at ~16 MiB.
    return 4 << 20, 32 << 20


def _pick_rows_tile(rows_f, c_lanes, itemsize, target_block_bytes):
    """Row tile: multiple of 8, block <= target, and >= 2 tiles when possible."""
    bytes_per_row = max(1, c_lanes * itemsize)
    max_rows = max(8, (target_block_bytes // bytes_per_row) // 8 * 8)
    # Cap at ~half the rows (rounded up to a sublane multiple) so the parallel
    # grid axis always has >= 2 tiles for v7x megacore / pipelining.
    half_up = max(8, ((rows_f + 1) // 2 + 7) // 8 * 8)
    return max(8, min(max_rows, half_up))


def constraint_norm_forward(x_tbc, mu, gamma, u, c, *, rows_tile=None,
                            donate_input=False):
    """Constraint_Norm forward.

    x_tbc : (T, B, C) input
    mu, gamma, u, c : (C,) per-channel parameters
    Returns (out_tbc, mean_c, var_c): the normalized + post-affine output in
    (T, B, C), and the per-channel batch statistics (shape (C,)) that the
    PyTorch module accumulates into its running buffers.
    """
    T, B, C = x_tbc.shape
    rows = T * B
    itemsize = jnp.dtype(x_tbc.dtype).itemsize

    # Lane-density fold: (rows, C) -> (rows/k, k*C) with k*C a multiple of 128.
    k = _fold_factor(rows, C)
    rows_f = rows // k
    c_lanes = C * k

    target_block_bytes, vmem_limit = _block_and_vmem_budget()
    if rows_tile is None:
        rows_tile = _pick_rows_tile(rows_f, c_lanes, itemsize,
                                    target_block_bytes)
    num_tiles = pl.cdiv(rows_f, rows_tile)
    need_mask = (rows_f % rows_tile) != 0

    # Free, contiguous reshape; C (possibly folded) stays on the lane axis.
    x2d = x_tbc.reshape(rows_f, c_lanes)

    # Fold per-channel constants once (no per-step rsqrt inside the kernel).
    gamma_f = gamma.astype(jnp.float32)
    a = jax.lax.rsqrt(gamma_f * gamma_f + EPS)
    b = -mu.astype(jnp.float32) * a
    params = jnp.stack(
        [a, b, u.astype(jnp.float32), c.astype(jnp.float32)], axis=0)  # (4, C)
    if k > 1:
        params = jnp.tile(params, (1, k))                              # (4, k*C)

    cost = pl.CostEstimate(
        flops=7 * rows * C,
        transcendentals=0,
        bytes_accessed=(2 * rows * C * itemsize          # read x + write out
                        + num_tiles * 2 * c_lanes * 4))  # per-tile stats

    out2d, pstat = pl.pallas_call(
        _make_kernel(rows_tile, rows_f, need_mask),
        grid=(num_tiles,),
        in_specs=[
            pl.BlockSpec((rows_tile, c_lanes), lambda i: (i, 0)),
            pl.BlockSpec((4, c_lanes), lambda i: (0, 0)),   # untiled params
        ],
        out_specs=(
            pl.BlockSpec((rows_tile, c_lanes), lambda i: (i, 0)),
            pl.BlockSpec((1, 2, c_lanes), lambda i: (i, 0, 0)),
        ),
        out_shape=(
            jax.ShapeDtypeStruct((rows_f, c_lanes), x_tbc.dtype),
            jax.ShapeDtypeStruct((num_tiles, 2, c_lanes), jnp.float32),
        ),
        compiler_params=pltpu.CompilerParams(
            dimension_semantics=("parallel",),   # independent tiles -> megacore
            vmem_limit_bytes=vmem_limit),
        cost_estimate=cost,
        input_output_aliases=({0: 0} if donate_input else {}),
    )(x2d, params)

    out_tbc = out2d.reshape(T, B, C)

    # Final tiny reduction + 1/(B*T) scale, done once outside the hot loop.
    stat = jnp.sum(pstat, axis=0)                   # (2, k*C)
    if k > 1:
        stat = stat.reshape(2, k, C).sum(axis=1)    # sum channel replicas
    inv_count = 1.0 / float(rows)
    mean_c = stat[0] * inv_count
    var_c = stat[1] * inv_count                      # == mean(xn^2 - 1) + 1

    # TODO(synk): the stateful running-buffer updates (self.mean += mean,
    # self.var += var, tracking_times += 1), the Lagrangian side tensors
    # (weight_mean = mean*xi_, weight_var = (var-1)*lambda_, backward-only),
    # and the training-time sample_noise path have no functional forward
    # equivalent; the per-batch stats are returned so a caller can accumulate.
    return out_tbc, mean_c, var_c


def _reference(x_tbc, mu, gamma, u, c):
    x = jnp.transpose(x_tbc, (1, 2, 0))        # (B, C, T), as the module does
    mu3 = mu.reshape(1, -1, 1)
    g3 = gamma.reshape(1, -1, 1)
    xn = (x - mu3) / jnp.sqrt(g3 ** 2 + EPS)
    mean = xn.mean(axis=(0, 2))
    var = (xn ** 2 - 1.0).mean(axis=(0, 2)) + 1.0
    out = xn * u.reshape(1, -1, 1) + c.reshape(1, -1, 1)
    return jnp.transpose(out, (2, 0, 1)), mean, var


if __name__ == "__main__":
    base_key = jax.random.PRNGKey(0)

    def run_case(case_idx, T, B, C):
        key = jax.random.fold_in(base_key, case_idx)
        kx, kmu, kg, ku, kc = jax.random.split(key, 5)
        x = jax.random.normal(kx, (T, B, C), dtype=jnp.float32)
        # Module defaults are mu=0, gamma=1, u=1, c=0; perturb so the kernel
        # does non-trivial work.
        mu = 0.1 * jax.random.normal(kmu, (C,), dtype=jnp.float32)
        gamma = 1.0 + 0.1 * jax.random.normal(kg, (C,), dtype=jnp.float32)
        u = 1.0 + 0.1 * jax.random.normal(ku, (C,), dtype=jnp.float32)
        c = 0.1 * jax.random.normal(kc, (C,), dtype=jnp.float32)

        out, mean, var = constraint_norm_forward(x, mu, gamma, u, c)
        out, mean, var = jax.block_until_ready((out, mean, var))

        ref_out, ref_mean, ref_var = _reference(x, mu, gamma, u, c)
        assert jnp.allclose(out, ref_out, rtol=1e-5, atol=1e-5)
        assert jnp.allclose(mean, ref_mean, rtol=1e-5, atol=1e-5)
        assert jnp.allclose(var, ref_var, rtol=1e-5, atol=1e-5)

    # Case 0: C=32 folds to 128 lanes (k=4), rows=512 -> 2 even lane-dense tiles.
    run_case(0, 128, 4, 32)
    # Case 1: rows = 75 (ragged), C=48 not foldable -> masked last tile path.
    run_case(1, 25, 3, 48)

    print("KERNEL_OK")
</pallas_src>

<mosaic_0001>
module attributes {stable_mosaic.version = 11 : i64} {
  func.func @kernel(%arg0: i32, %arg1: memref<64x128xf32, #tpu.memory_space<vmem>>, %arg2: memref<4x128xf32, #tpu.memory_space<vmem>>, %arg3: memref<64x128xf32, #tpu.memory_space<vmem>>, %arg4: memref<1x2x128xf32, #tpu.memory_space<vmem>>) attributes {dimension_semantics = [#tpu.dimension_semantics<parallel>], iteration_bounds = array<i64: 2>, scalar_prefetch = 0 : i64, scratch_operands = 0 : i64, tpu.core_type = #tpu.core_type<tc>, window_params = [{transform_indices = @transform_0, window_bounds = array<i64: 64, 128>}, {pipeline_mode = #tpu.pipeline_mode<synchronous>, transform_indices = @transform_1, window_bounds = array<i64: 4, 128>}, {transform_indices = @transform_2, window_bounds = array<i64: 64, 128>}, {transform_indices = @transform_3, window_bounds = array<i64: 1, 2, 128>}]} {
    %c0 = arith.constant 0 : index
    %c0_0 = arith.constant 0 : index
    %0 = vector.load %arg1[%c0, %c0_0] : memref<64x128xf32, #tpu.memory_space<vmem>>, vector<64x128xf32>
    %c0_1 = arith.constant 0 : index
    %c0_2 = arith.constant 0 : index
    %1 = vector.load %arg2[%c0_1, %c0_2] : memref<4x128xf32, #tpu.memory_space<vmem>>, vector<4x128xf32>
    %2 = vector.extract_strided_slice %1 {offsets = [0, 0], sizes = [1, 128], strides = [1, 1]} : vector<4x128xf32> to vector<1x128xf32>
    %3 = vector.extract_strided_slice %1 {offsets = [1, 0], sizes = [1, 128], strides = [1, 1]} : vector<4x128xf32> to vector<1x128xf32>
    %4 = vector.extract_strided_slice %1 {offsets = [2, 0], sizes = [1, 128], strides = [1, 1]} : vector<4x128xf32> to vector<1x128xf32>
    %5 = vector.extract_strided_slice %1 {offsets = [3, 0], sizes = [1, 128], strides = [1, 1]} : vector<4x128xf32> to vector<1x128xf32>
    %6 = vector.broadcast %2 : vector<1x128xf32> to vector<64x128xf32>
    %7 = arith.mulf %0, %6 : vector<64x128xf32>
    %8 = vector.broadcast %3 : vector<1x128xf32> to vector<64x128xf32>
    %9 = arith.addf %7, %8 : vector<64x128xf32>
    %10 = vector.broadcast %4 : vector<1x128xf32> to vector<64x128xf32>
    %11 = arith.mulf %9, %10 : vector<64x128xf32>
    %12 = vector.broadcast %5 : vector<1x128xf32> to vector<64x128xf32>
    %13 = arith.addf %11, %12 : vector<64x128xf32>
    %c0_3 = arith.constant 0 : index
    %c0_4 = arith.constant 0 : index
    %14 = vector.load %arg3[%c0_3, %c0_4] : memref<64x128xf32, #tpu.memory_space<vmem>>, vector<64x128xf32>
    tpu.vector_store %arg3[%c0_3, %c0_4], %13 {strides = array<i32>} : memref<64x128xf32, #tpu.memory_space<vmem>>, vector<64x128xf32>,
    %cst = arith.constant dense<0.000000e+00> : vector<128xf32>
    %15 = vector.multi_reduction <add>, %9, %cst [0] : vector<64x128xf32> to vector<128xf32>
    %16 = vector.shape_cast %15 : vector<128xf32> to vector<1x128xf32>
    %17 = arith.mulf %9, %9 : vector<64x128xf32>
    %cst_5 = arith.constant dense<0.000000e+00> : vector<128xf32>
    %18 = vector.multi_reduction <add>, %17, %cst_5 [0] : vector<64x128xf32> to vector<128xf32>
    %19 = vector.shape_cast %18 : vector<128xf32> to vector<1x128xf32>
    %20 = tpu.concatenate %16, %19 in 0 : vector<1x128xf32>, vector<1x128xf32> -> vector<2x128xf32>
    %21 = vector.shape_cast %20 : vector<2x128xf32> to vector<1x2x128xf32>
    %c0_6 = arith.constant 0 : index
    %c0_7 = arith.constant 0 : index
    %c0_8 = arith.constant 0 : index
    %22 = vector.load %arg4[%c0_6, %c0_7, %c0_8] : memref<1x2x128xf32, #tpu.memory_space<vmem>>, vector<1x2x128xf32>
    tpu.vector_store %arg4[%c0_6, %c0_7, %c0_8], %21 {strides = array<i32>} : memref<1x2x128xf32, #tpu.memory_space<vmem>>, vector<1x2x128xf32>,
    return
  }
  func.func @transform_0(%arg0: i32) -> (i32, i32) {
    %c0_i32 = arith.constant 0 : i32
    %c0_i32_0 = arith.constant 0 : i32
    return %arg0, %c0_i32 : i32, i32
  }
  func.func @transform_1(%arg0: i32) -> (i32, i32) {
    %c0_i32 = arith.constant 0 : i32
    %c0_i32_0 = arith.constant 0 : i32
    %c0_i32_1 = arith.constant 0 : i32
    return %c0_i32, %c0_i32_0 : i32, i32
  }
  func.func @transform_2(%arg0: i32) -> (i32, i32) {
    %c0_i32 = arith.constant 0 : i32
    %c0_i32_0 = arith.constant 0 : i32
    return %arg0, %c0_i32 : i32, i32
  }
  func.func @transform_3(%arg0: i32) -> (i32, i32, i32) {
    %c0_i32 = arith.constant 0 : i32
    %c0_i32_0 = arith.constant 0 : i32
    %c0_i32_1 = arith.constant 0 : i32
    return %arg0, %c0_i32, %c0_i32_0 : i32, i32, i32
  }
}

</mosaic_0001>

<llo_original>
// kernel: tpu_custom_call.1
$region0: #{tpu_custom_call.1}
  #allocation0 [shape = 'u32[]', space=smem, size = 0x4, offset = 0x4, fixed_abs, tag = 'smem constant byte address 0x4 - core index']
  #allocation1 [shape = 'u32[144,128]{1,0:T(1,128)}', space=vmem, size = 0x12000, scoped, tag = 'internal scratch']
  %s0 = inlined_call_operand.hbm [shape: f32[128,128], index: 0, kind: input, shape index: {}]
  %s1 = inlined_call_operand.hbm [shape: f32[4,128], index: 1, kind: input, shape index: {}]
  %s2 = inlined_call_operand.hbm [shape: f32[128,128], index: 2, kind: output, shape index: {0}]
  %s3 = inlined_call_operand.hbm [shape: f32[2,2,128], index: 3, kind: output, shape index: {1}]
  %4 = xla_tuple %s2, %s3
  %s5 = sld [smem:[#allocation0]]
  $region57: #{tpu_custom_call.1} parent=0
    _
  %s7 = ssub.s32 1, %s5
  %s8 = scalar_select 0, %s7, %s5
  $region1: #{tpu_custom_call.1} parent=0
    #allocation2 [shape = 'u8[65536]{0}', space=vmem, size = 0x10000, scoped, tag = 'input window, operand 0']
    #allocation3 [shape = 's32[2]{0}', space=sflag, size = 0x8, scoped, tag = 'scoped memory for tpu_custom_call.1']
    #allocation4 [shape = 's32[2]{0}', space=sflag, size = 0x8, scoped, tag = 'scoped memory for tpu_custom_call.1']
    #allocation5 [shape = 'u8[2048]{0}', space=vmem, size = 0x800, scoped, tag = 'input window, operand 1, single buffered']
    #allocation6 [shape = 's32[1]{0}', space=sflag, size = 0x4, scoped, tag = 'scoped memory for tpu_custom_call.1']
    #allocation7 [shape = 'u8[65536]{0}', space=vmem, size = 0x10000, scoped, tag = 'output window, operand 0']
    #allocation8 [shape = 'u8[2048]{0}', space=vmem, size = 0x800, scoped, tag = 'output window, operand 1']
    #allocation9 [shape = 's32[2]{0}', space=sflag, size = 0x8, scoped, tag = 'scoped memory for tpu_custom_call.1']
    %9 = vsyncpa [#allocation3], 0
    %s10 = scalar_lea.sflag [#allocation3], 1
    %11 = vsyncpa %s10, 0
    %12 = vsyncpa [#allocation6], 0
    %13 = vsyncpa [#allocation4], 0
    %s14 = scalar_lea.sflag [#allocation4], 1
    %15 = vsyncpa %s14, 0
    %16 = vsyncpa [#allocation9], 0
    %s17 = scalar_lea.sflag [#allocation9], 1
    %18 = vsyncpa %s17, 0
    loop: start=0, step=1, limit=4
    $region2: #{tpu_custom_call.1} parent=1 // loop_pre_header
      _
    $region3: #{tpu_custom_call.1} parent=1 // loop_header
      %s20 = sphi 0, %s24
      %p21 = scmp.ge.s32.totalorder %s20, 4
      %s30 = sphi 0, %s32
      %s33 = sphi 0, %s30
      %s34 = sphi 0, %s33
      %s50 = sphi 0, %s34
      %s54 = sphi 0, %s54
      %s56 = sphi 0, %s54
      %s57 = sphi 0, %s56
      %s71 = sphi 0, %s57
      %s77 = sphi 0, %s79
      %s80 = sphi 0, %s77
      %s81 = sphi 0, %s80
      %s97 = sphi 0, %s81
      %s103 = sphi 0, %s105
      %s106 = sphi 0, %s103
      %s107 = sphi 0, %s106
      %s123 = sphi 0, %s107
    $region4: #{tpu_custom_call.1} parent=1 // loop_header_branch
      %23 = sbr.rel (%p21) target = $region8
    $region5: #{tpu_custom_call.1} parent=1 // loop_body
      %s25 = ssub.s32 %s20, 1
      %s26 = ssub.s32 %s20, 2
      %s27 = sadd.s32 %s20, 1
      %s28 = ssub.s32 %s20, %s27
      %p29 = scmp.eq.s32.totalorder %s28, 0
      %s31 = sadd.s32 %s30, 1
      %s32 = scalar_select %p29, %s30, %s31
      %p35 = pneg %p29
      %p36 = scmp.eq.s32.totalorder %s20, 1
      %p37 = por %p35, %p36
      %p38 = scmp.ne.s32.totalorder %s30, %s33
      %p39 = scmp.eq.s32.totalorder %s20, 0
      %p40 = por %p38, %p39
      %p41 = scmp.ne.s32.totalorder %s30, %s33
      %p42 = scmp.eq.s32.totalorder %s25, 1
      %p43 = por %p41, %p42
      %p44 = scmp.ne.s32.totalorder %s33, %s34
      %p45 = scmp.eq.s32.totalorder %s25, 0
      %p46 = por %p44, %p45
      %p47 = scmp.ne.s32.totalorder %s33, %s34
      %p48 = scmp.eq.s32.totalorder %s26, 1
      %p49 = por %p47, %p48
      %p51 = scmp.ne.s32.totalorder %s34, %s50
      %p52 = scmp.eq.s32.totalorder %s26, 0
      %p53 = por %p51, %p52
      %s55 = sadd.s32 %s54, 1
      %p58 = scmp.eq.s32.totalorder %s20, 1
      %p59 = scmp.ne.s32.totalorder %s54, %s56
      %p60 = scmp.eq.s32.totalorder %s20, 0
      %p61 = por %p59, %p60
      %p62 = scmp.ne.s32.totalorder %s54, %s56
      %p63 = scmp.eq.s32.totalorder %s25, 1
      %p64 = por %p62, %p63
      %p65 = scmp.ne.s32.totalorder %s56, %s57
      %p66 = scmp.eq.s32.totalorder %s25, 0
      %p67 = por %p65, %p66
      %p68 = scmp.ne.s32.totalorder %s56, %s57
      %p69 = scmp.eq.s32.totalorder %s26, 1
      %p70 = por %p68, %p69
      %p72 = scmp.ne.s32.totalorder %s57, %s71
      %p73 = scmp.eq.s32.totalorder %s26, 0
      %p74 = por %p72, %p73
      %s75 = ssub.s32 %s20, %s27
      %p76 = scmp.eq.s32.totalorder %s75, 0
      %s78 = sadd.s32 %s77, 1
      %s79 = scalar_select %p76, %s77, %s78
      %p82 = pneg %p76
      %p83 = scmp.eq.s32.totalorder %s20, 1
      %p84 = por %p82, %p83
      %p85 = scmp.ne.s32.totalorder %s77, %s80
      %p86 = scmp.eq.s32.totalorder %s20, 0
      %p87 = por %p85, %p86
      %p88 = scmp.ne.s32.totalorder %s77, %s80
      %p89 = scmp.eq.s32.totalorder %s25, 1
      %p90 = por %p88, %p89
      %p91 = scmp.ne.s32.totalorder %s80, %s81
      %p92 = scmp.eq.s32.totalorder %s25, 0
      %p93 = por %p91, %p92
      %p94 = scmp.ne.s32.totalorder %s80, %s81
      %p95 = scmp.eq.s32.totalorder %s26, 1
      %p96 = por %p94, %p95
      %p98 = scmp.ne.s32.totalorder %s81, %s97
      %p99 = scmp.eq.s32.totalorder %s26, 0
      %p100 = por %p98, %p99
      %s101 = ssub.s32 %s20, %s27
      %p102 = scmp.eq.s32.totalorder %s101, 0
      %s104 = sadd.s32 %s103, 1
      %s105 = scalar_select %p102, %s103, %s104
      %p108 = pneg %p102
      %p109 = scmp.eq.s32.totalorder %s20, 1
      %p110 = por %p108, %p109
      %p111 = scmp.ne.s32.totalorder %s103, %s106
      %p112 = scmp.eq.s32.totalorder %s20, 0
      %p113 = por %p111, %p112
      %p114 = scmp.ne.s32.totalorder %s103, %s106
      %p115 = scmp.eq.s32.totalorder %s25, 1
      %p116 = por %p114, %p115
      %p117 = scmp.ne.s32.totalorder %s106, %s107
      %p118 = scmp.eq.s32.totalorder %s25, 0
      %p119 = por %p117, %p118
      %p120 = scmp.ne.s32.totalorder %s106, %s107
      %p121 = scmp.eq.s32.totalorder %s26, 1
      %p122 = por %p120, %p121
      %p124 = scmp.ne.s32.totalorder %s107, %s123
      %p125 = scmp.eq.s32.totalorder %s26, 0
      %p126 = por %p124, %p125
      %p127 = scmp.le.s32.totalorder 1, %s20
      %p128 = scmp.lt.s32.totalorder %s20, 3
      %p129 = pnand %p127, %p128
      %p130 = pneg %p129
      // Predicated region
      $region9: #{tpu_custom_call.1} parent=5 // pred_check
        _
      $region10: #{tpu_custom_call.1} parent=5 // pred_check_branch
        %132 = sbr.rel (%p129) target = $region12
      $region11: #{tpu_custom_call.1} parent=5 // pred_region
        %s133 = ssub.s32 %s20, 1
        // Predicated region
        $region13: #{tpu_custom_call.1} parent=11 // pred_check
          %p134 = pneg %p67
        $region14: #{tpu_custom_call.1} parent=11 // pred_check_branch
          %136 = sbr.rel (%p134) target = $region16
        $region15: #{tpu_custom_call.1} parent=11 // pred_region
          %s138 = ssub.s32 64, 64
          %139 = vsyncadd [#allocation6], %s138
          %s141 = sshll.u32 [#allocation5], 4
          %s142 = int_to_ptr.vmem [resolvable:$true] %s141
          %144 = dma.hbm_to_vmem [thread:$0]  %s1, 64, %s142, [#allocation6]
        $region16: #{tpu_custom_call.1} parent=11 // pred_fallthru
          _
      $region12: #{tpu_custom_call.1} parent=5 // pred_fallthru
        _
      %p145 = scmp.lt.s32.totalorder %s20, 2
      // Predicated region
      $region17: #{tpu_custom_call.1} parent=5 // pred_check
        %p146 = pneg %p145
      $region18: #{tpu_custom_call.1} parent=5 // pred_check_branch
        %148 = sbr.rel (%p146) target = $region20
      $region19: #{tpu_custom_call.1} parent=5 // pred_region
        // Predicated region
        $region21: #{tpu_custom_call.1} parent=19 // pred_check
          %p149 = pneg %p40
        $region22: #{tpu_custom_call.1} parent=19 // pred_check_branch
          %151 = sbr.rel (%p149) target = $region24
        $region23: #{tpu_custom_call.1} parent=19 // pred_region
          %s152 = sand.u32 %s30, 1
          %s153 = scalar_lea.sflag [#allocation3], %s152
          %s154 = sand.u32 %s30, 1
          %s155 = smul.addr %s154, 64
          %s156 = scalar_lea.vmem [#allocation2], %s155
          %s157 = smul.u32 8, %s20
          %s159 = ssub.s32 1024, 1024
          %160 = vsyncadd %s153, %s159
          %s161 = smul.addr %s157, 128
          %s162 = scalar_lea.hbm %s0, %s161
          %s163 = sshll.u32 %s156, 4
          %s164 = int_to_ptr.vmem [resolvable:$true] %s163
          %169 = dma.hbm_to_vmem [thread:$0]  %s162, 1024, %s164, %s153, 128, 128, 8
        $region24: #{tpu_custom_call.1} parent=19 // pred_fallthru
          _
      $region20: #{tpu_custom_call.1} parent=5 // pred_fallthru
        _
      %p170 = scmp.le.s32.totalorder 1, %s20
      %p171 = scmp.lt.s32.totalorder %s20, 3
      %p172 = pnand %p170, %p171
      %p173 = pneg %p172
      // Predicated region
      $region25: #{tpu_custom_call.1} parent=5 // pred_check
        _
      $region26: #{tpu_custom_call.1} parent=5 // pred_check_branch
        %175 = sbr.rel (%p172) target = $region28
      $region27: #{tpu_custom_call.1} parent=5 // pred_region
        %s176 = ssub.s32 %s20, 1
        %s177 = sand.u32 %s33, 1
        %s178 = scalar_lea.sflag [#allocation3], %s177
        %s179 = sand.u32 %s33, 1
        %s180 = smul.addr %s179, 64
        %s181 = scalar_lea.vmem [#allocation2], %s180
        // Predicated region
        $region29: #{tpu_custom_call.1} parent=27 // pred_check
          %p182 = pneg %p46
        $region30: #{tpu_custom_call.1} parent=27 // pred_check_branch
          %184 = sbr.rel (%p182) target = $region32
        $region31: #{tpu_custom_call.1} parent=27 // pred_region
          %185 = dma.done %s178, 1024
        $region32: #{tpu_custom_call.1} parent=27 // pred_fallthru
          _
        // Predicated region
        $region33: #{tpu_custom_call.1} parent=27 // pred_check
          %p186 = pneg %p67
        $region34: #{tpu_custom_call.1} parent=27 // pred_check_branch
          %188 = sbr.rel (%p186) target = $region36
        $region35: #{tpu_custom_call.1} parent=27 // pred_region
          %189 = dma.done [#allocation6], 64
        $region36: #{tpu_custom_call.1} parent=27 // pred_fallthru
          _
        %s190 = sand.u32 %s33, 1
        %s191 = scalar_lea.sflag [#allocation3], %s190
        %s192 = sand.u32 %s33, 1
        %s193 = smul.addr %s192, 64
        %s194 = scalar_lea.vmem [#allocation2], %s193
        %p195 = pneg %p46
        %p196 = pneg %p43
        %p197 = pneg %p67
        %p198 = pneg %p64
        %p199 = pneg %p93
        %p200 = pneg %p90
        %s201 = sand.u32 %s80, 1
        %s202 = scalar_lea.sflag [#allocation4], %s201
        %s203 = sand.u32 %s80, 1
        %s204 = smul.addr %s203, 64
        %s205 = scalar_lea.vmem [#allocation7], %s204
        %p206 = pneg %p119
        %p207 = pneg %p116
        %s208 = sand.u32 %s106, 1
        %s209 = scalar_lea.sflag [#allocation9], %s208
        %s210 = sand.u32 %s106, 1
        %s211 = smul.addr %s210, 2
        %s212 = scalar_lea.vmem [#allocation8], %s211
        %s213 = smul.u32 8, %s25
        %s214 = smul.u32 8, %s25
        %v215 = vld [vmem:[%s181] sm:$0xff]
        %v216 = vld [vmem:[%s181 + $0x8] sm:$0xff]
        %v217 = vld [vmem:[%s181 + $0x10] sm:$0xff]
        %v218 = vld [vmem:[%s181 + $0x18] sm:$0xff]
        %v219 = vld [vmem:[%s181 + $0x20] sm:$0xff]
        %v220 = vld [vmem:[%s181 + $0x28] sm:$0xff]
        %v221 = vld [vmem:[%s181 + $0x30] sm:$0xff]
        %v222 = vld [vmem:[%s181 + $0x38] sm:$0xff]
        %v223 = vld [vmem:[#allocation5] sm:$0xf]
        %v224 = vlaneseq
        %v225 = vshrl.u32 %v224, 7
        %v226 = vsub.s32 0, %v225
        %v227 = vrot.slane %v223, %v226
        %v228 = vmul.f32 %v215, %v227
        %v229 = vmul.f32 %v216, %v227
        %v230 = vmul.f32 %v217, %v227
        %v231 = vmul.f32 %v218, %v227
        %v232 = vmul.f32 %v219, %v227
        %v233 = vmul.f32 %v220, %v227
        %v234 = vmul.f32 %v221, %v227
        %v235 = vmul.f32 %v222, %v227
        %v236 = vlaneseq
        %v237 = vshrl.u32 %v236, 7
        %v238 = vsub.s32 1, %v237
        %v239 = vrot.slane %v223, %v238
        %v240 = vadd.f32 %v228, %v239
        %v241 = vadd.f32 %v229, %v239
        %v242 = vadd.f32 %v230, %v239
        %v243 = vadd.f32 %v231, %v239
        %v244 = vadd.f32 %v232, %v239
        %v245 = vadd.f32 %v233, %v239
        %v246 = vadd.f32 %v234, %v239
        %v247 = vadd.f32 %v235, %v239
        %v248 = vlaneseq
        %v249 = vshrl.u32 %v248, 7
        %v250 = vsub.s32 2, %v249
        %v251 = vrot.slane %v223, %v250
        %v252 = vmul.f32 %v240, %v251
        %v253 = vmul.f32 %v241, %v251
        %v254 = vmul.f32 %v242, %v251
        %v255 = vmul.f32 %v243, %v251
        %v256 = vmul.f32 %v244, %v251
        %v257 = vmul.f32 %v245, %v251
        %v258 = vmul.f32 %v246, %v251
        %v259 = vmul.f32 %v247, %v251
        %v260 = vlaneseq
        %v261 = vshrl.u32 %v260, 7
        %v262 = vsub.s32 3, %v261
        %v263 = vrot.slane %v223, %v262
        %v264 = vadd.f32 %v252, %v263
        %v265 = vadd.f32 %v253, %v263
        %v266 = vadd.f32 %v254, %v263
        %v267 = vadd.f32 %v255, %v263
        %v268 = vadd.f32 %v256, %v263
        %v269 = vadd.f32 %v257, %v263
        %v270 = vadd.f32 %v258, %v263
        %v271 = vadd.f32 %v259, %v263
        %272 = vst [vmem:[%s205] sm:$0xff] %v264
        %273 = vst [vmem:[%s205 + $0x8] sm:$0xff] %v265
        %274 = vst [vmem:[%s205 + $0x10] sm:$0xff] %v266
        %275 = vst [vmem:[%s205 + $0x18] sm:$0xff] %v267
        %276 = vst [vmem:[%s205 + $0x20] sm:$0xff] %v268
        %277 = vst [vmem:[%s205 + $0x28] sm:$0xff] %v269
        %278 = vst [vmem:[%s205 + $0x30] sm:$0xff] %v270
        %279 = vst [vmem:[%s205 + $0x38] sm:$0xff] %v271
        %v280 = vadd.f32 %v240, %v241
        %v281 = vadd.f32 %v280, %v242
        %v282 = vadd.f32 %v281, %v243
        %v283 = vadd.f32 %v282, %v244
        %v284 = vadd.f32 %v283, %v245
        %v285 = vadd.f32 %v284, %v246
        %v286 = vadd.f32 %v285, %v247
        %v287 = vrot.slane %v286, 4
        %v288 = vadd.f32 %v286, %v287
        %v289 = vrot.slane %v288, 2
        %v290 = vadd.f32 %v288, %v289
        %v291 = vrot.slane %v290, 1
        %v292 = vadd.f32 %v290, %v291
        %v293 = vmul.f32 %v240, %v240
        %v294 = vmul.f32 %v241, %v241
        %v295 = vmul.f32 %v242, %v242
        %v296 = vmul.f32 %v243, %v243
        %v297 = vmul.f32 %v244, %v244
        %v298 = vmul.f32 %v245, %v245
        %v299 = vmul.f32 %v246, %v246
        %v300 = vmul.f32 %v247, %v247
        %v301 = vadd.f32 %v293, %v294
        %v302 = vadd.f32 %v301, %v295
        %v303 = vadd.f32 %v302, %v296
        %v304 = vadd.f32 %v303, %v297
        %v305 = vadd.f32 %v304, %v298
        %v306 = vadd.f32 %v305, %v299
        %v307 = vadd.f32 %v306, %v300
        %v308 = vrot.slane %v307, 4
        %v309 = vadd.f32 %v307, %v308
        %v310 = vrot.slane %v309, 2
        %v311 = vadd.f32 %v309, %v310
        %v312 = vrot.slane %v311, 1
        %v313 = vadd.f32 %v311, %v312
        %vm314 = vcmask 1040384
        %v315 = vsel %vm314, %v292, %v313
        %316 = vst [vmem:[%s212] sm:$0x3] %v315
        %s317 = sand.u32 %s80, 1
        %s318 = scalar_lea.sflag [#allocation4], %s317
        %s319 = sand.u32 %s80, 1
        %s320 = smul.addr %s319, 64
        %s321 = scalar_lea.vmem [#allocation7], %s320
        %s322 = sand.u32 %s106, 1
        %s323 = scalar_lea.sflag [#allocation9], %s322
        %s324 = sand.u32 %s106, 1
        %s325 = smul.addr %s324, 2
        %s326 = scalar_lea.vmem [#allocation8], %s325
        // Predicated region
        $region37: #{tpu_custom_call.1} parent=27 // pred_check
          %p327 = pneg %p90
        $region38: #{tpu_custom_call.1} parent=27 // pred_check_branch
          %329 = sbr.rel (%p327) target = $region40
        $region39: #{tpu_custom_call.1} parent=27 // pred_region
          %s330 = smul.u32 8, %s25
          %s332 = ssub.s32 1024, 1024
          %333 = vsyncadd %s318, %s332
          %s334 = smul.addr %s330, 128
          %s335 = scalar_lea.hbm %s2, %s334
          %s336 = sshll.u32 %s321, 4
          %s337 = int_to_ptr.vmem [resolvable:$true] %s336
          %342 = dma.vmem_to_hbm [thread:$0]  %s337, 1024, %s335, %s318, 128, 128, 8
        $region40: #{tpu_custom_call.1} parent=27 // pred_fallthru
          _
        // Predicated region
        $region41: #{tpu_custom_call.1} parent=27 // pred_check
          %p343 = pneg %p116
        $region42: #{tpu_custom_call.1} parent=27 // pred_check_branch
          %345 = sbr.rel (%p343) target = $region44
        $region43: #{tpu_custom_call.1} parent=27 // pred_region
          %s347 = ssub.s32 32, 32
          %348 = vsyncadd %s323, %s347
          %s349 = smul.addr %s25, 32
          %s350 = scalar_lea.hbm %s3, %s349
          %s352 = sshll.u32 %s326, 4
          %s353 = int_to_ptr.vmem [resolvable:$true] %s352
          %355 = dma.vmem_to_hbm [thread:$0]  %s353, 32, %s350, %s323
        $region44: #{tpu_custom_call.1} parent=27 // pred_fallthru
          _
      $region28: #{tpu_custom_call.1} parent=5 // pred_fallthru
        _
      %p356 = scmp.le.s32.totalorder 2, %s20
      // Predicated region
      $region45: #{tpu_custom_call.1} parent=5 // pred_check
        %p357 = pneg %p356
      $region46: #{tpu_custom_call.1} parent=5 // pred_check_branch
        %359 = sbr.rel (%p357) target = $region48
      $region47: #{tpu_custom_call.1} parent=5 // pred_region
        %s360 = ssub.s32 %s20, 2
        // Predicated region
        $region49: #{tpu_custom_call.1} parent=47 // pred_check
          %p361 = pneg %p96
        $region50: #{tpu_custom_call.1} parent=47 // pred_check_branch
          %363 = sbr.rel (%p361) target = $region52
        $region51: #{tpu_custom_call.1} parent=47 // pred_region
          %s364 = sand.u32 %s81, 1
          %s365 = scalar_lea.sflag [#allocation4], %s364
          %s366 = sand.u32 %s81, 1
          %s367 = smul.addr %s366, 64
          %s368 = scalar_lea.vmem [#allocation7], %s367
          %369 = dma.done %s365, 1024
        $region52: #{tpu_custom_call.1} parent=47 // pred_fallthru
          _
        // Predicated region
        $region53: #{tpu_custom_call.1} parent=47 // pred_check
          %p370 = pneg %p122
        $region54: #{tpu_custom_call.1} parent=47 // pred_check_branch
          %372 = sbr.rel (%p370) target = $region56
        $region55: #{tpu_custom_call.1} parent=47 // pred_region
          %s373 = sand.u32 %s107, 1
          %s374 = scalar_lea.sflag [#allocation9], %s373
          %s375 = sand.u32 %s107, 1
          %s376 = smul.addr %s375, 2
          %s377 = scalar_lea.vmem [#allocation8], %s376
          %378 = dma.done %s374, 32
        $region56: #{tpu_custom_call.1} parent=47 // pred_fallthru
          _
      $region48: #{tpu_custom_call.1} parent=5 // pred_fallthru
        _
    $region6: #{tpu_custom_call.1} parent=1 // loop_footer
      %s24 = sadd.s32 1, %s20
    $region7: #{tpu_custom_call.1} parent=1 // loop_footer_branch
      %19 = sbr.rel target = $region3
    $region8: #{tpu_custom_call.1} parent=1 // loop_exit
      _
    %379 = vsyncpa [#allocation3], 1
    %s380 = scalar_lea.sflag [#allocation3], 1
    %381 = vsyncpa %s380, 1
    %382 = vsyncpa [#allocation6], 1
    %383 = vsyncpa [#allocation4], 1
    %s384 = scalar_lea.sflag [#allocation4], 1
    %385 = vsyncpa %s384, 1
    %386 = vsyncpa [#allocation9], 1
    %s387 = scalar_lea.sflag [#allocation9], 1
    %388 = vsyncpa %s387, 1

</llo_original>
